<compile_context>
chip_gen: v7x
topology: tpu7x:2x2x1
jax: 0.10.0
libtpu: 0.0.40
codegen_flags: <defaults>
</compile_context>

<pallas_src>
import jax
import jax.numpy as jnp
from jax.experimental import pallas as pl
from jax.experimental.pallas import tpu as pltpu


def _sage3_fused_kernel(a_ref, x_ref,
                        w0_ref, b0_ref,
                        w1_ref, b1_ref,
                        w2_ref, b2_ref,
                        o_ref):
    """Fused 3-layer SAGEConv('mean') forward for one subgraph (one grid step).

    Per layer, with W = [W_self ; W_neigh] pre-stacked along the K (row) dim:
        h_neigh = A @ h                          # aggregation at width F_in
        h_cat   = [h | h_neigh]                  # K-stack along lanes
        z       = h_cat @ W + b                  # one MXU matmul, K = 2*F_in
    ReLU after layers 0 and 1 (Dropout = identity, eval mode).
    """
    a = a_ref[0].astype(jnp.bfloat16)            # [N, N]   (in-kernel bf16 cast)
    h = x_ref[0].astype(jnp.bfloat16)            # [N, F0]

    def sage_layer(h, w_ref, b_ref):
        h_neigh = jnp.dot(a, h,
                          preferred_element_type=jnp.float32).astype(jnp.bfloat16)
        h_cat = jnp.concatenate([h, h_neigh], axis=-1)        # [N, 2*F_in] bf16
        return jnp.dot(h_cat, w_ref[...],
                       preferred_element_type=jnp.float32) + b_ref[...]

    # ----- layer 0 -----
    h = jnp.maximum(sage_layer(h, w0_ref, b0_ref), 0.0).astype(jnp.bfloat16)
    # ----- layer 1 -----
    h = jnp.maximum(sage_layer(h, w1_ref, b1_ref), 0.0).astype(jnp.bfloat16)
    # ----- layer 2 (no ReLU), classifier output lane-padded to 128 -----
    o_ref[0] = sage_layer(h, w2_ref, b2_ref).astype(o_ref.dtype)


def prepare_sage_params(params):
    """One-time host-side weight packing (hoisted out of the per-call path).

    Returns K-stacked bf16 weights [W_self ; W_neigh] per layer and fp32 biases;
    the classifier layer's output dim is zero-padded to a multiple of 128 lanes.
    """
    (ws0, wn0, b0), (ws1, wn1, b1), (ws2, wn2, b2) = params
    c = ws2.shape[1]
    c_pad = ((c + 127) // 128) * 128

    w0 = jnp.concatenate([ws0, wn0], axis=0).astype(jnp.bfloat16)    # [2*F0, h0]
    w1 = jnp.concatenate([ws1, wn1], axis=0).astype(jnp.bfloat16)    # [2*h0, h1]
    w2f = jnp.concatenate([ws2, wn2], axis=0)                        # [2*h1, c]
    w2 = (jnp.zeros((w2f.shape[0], c_pad), jnp.float32)
          .at[:, :c].set(w2f)).astype(jnp.bfloat16)                  # [2*h1, c_pad]

    b0p = b0.reshape(1, -1).astype(jnp.float32)
    b1p = b1.reshape(1, -1).astype(jnp.float32)
    b2p = jnp.zeros((1, c_pad), jnp.float32).at[:, :c].set(b2.reshape(1, -1))
    return (w0, b0p, w1, b1p, w2, b2p)


def sage_forward(a, x, packed, n_classes):
    """3-layer SAGE forward, one fused Pallas kernel over G subgraphs.

    a: [G, N, N] (or [N, N]) row-normalized mean adjacency, fp32.
    x: [G, N, F] (or [N, F]) node features, fp32.
    packed: output of prepare_sage_params().
    Returns: [G, N, n_classes] (or [N, n_classes]) fp32 logits.
    """
    w0, b0, w1, b1, w2, b2 = packed
    squeeze = a.ndim == 2
    if squeeze:
        a, x = a[None], x[None]
    g, n, _ = a.shape
    f0 = x.shape[-1]
    c_pad = w2.shape[1]

    sub = lambda i: (i, 0, 0)       # one subgraph per grid step
    rep = lambda i: (0, 0)          # weights: same (resident) block every step

    out_pad = pl.pallas_call(
        _sage3_fused_kernel,
        out_shape=jax.ShapeDtypeStruct((g, n, c_pad), jnp.float32),
        grid_spec=pltpu.PrefetchScalarGridSpec(
            num_scalar_prefetch=0,
            grid=(g,),
            in_specs=[
                pl.BlockSpec((1, n, n), sub),        # A  (mean adjacency, fp32)
                pl.BlockSpec((1, n, f0), sub),       # X
                pl.BlockSpec(tuple(w0.shape), rep),  # [W_self0 ; W_neigh0]
                pl.BlockSpec(tuple(b0.shape), rep),
                pl.BlockSpec(tuple(w1.shape), rep),  # [W_self1 ; W_neigh1]
                pl.BlockSpec(tuple(b1.shape), rep),
                pl.BlockSpec(tuple(w2.shape), rep),  # lane-padded classifier
                pl.BlockSpec(tuple(b2.shape), rep),
            ],
            out_specs=pl.BlockSpec((1, n, c_pad), sub),
        ),
        compiler_params=pltpu.CompilerParams(
            dimension_semantics=("parallel",),       # subgraphs across v7x TCs
            vmem_limit_bytes=32 * 1024 * 1024,       # > v5e's 16 MiB default
        ),
    )(a, x, w0, b0, w1, b1, w2, b2)

    out = out_pad[..., :n_classes]
    return out[0] if squeeze else out


def sage_reference(a, x, params):
    """Pure-JAX fp32 reference (matches the original per-layer semantics)."""
    h = x
    n_layers = len(params)
    for l, (ws, wn, b) in enumerate(params):
        h_neigh = a @ h
        h = h @ ws + h_neigh @ wn + b
        if l != n_layers - 1:
            h = jnp.maximum(h, 0.0)
    return h


def make_params(key, in_feats, n_hidden, n_classes):
    dims = [(in_feats, n_hidden), (n_hidden, n_hidden), (n_hidden, n_classes)]
    params = []
    for (fin, fout) in dims:
        key, k1, k2 = jax.random.split(key, 3)
        scale = jnp.sqrt(2.0 / (fin + fout)).astype(jnp.float32)
        w_self = jax.random.normal(k1, (fin, fout), jnp.float32) * scale
        w_neigh = jax.random.normal(k2, (fin, fout), jnp.float32) * scale
        b = jnp.zeros((fout,), jnp.float32)
        params.append((w_self, w_neigh, b))
    return params


if __name__ == "__main__":
    G = 4           # number of cluster subgraphs (batched over the grid)
    N = 64          # nodes per subgraph
    IN_FEATS = 32
    N_HIDDEN = 32
    N_CLASSES = 8

    key = jax.random.PRNGKey(0)
    k_adj, k_x, k_p = jax.random.split(key, 3)

    # Deterministic random graphs; row-normalized mean adjacency per subgraph.
    adj = jax.random.bernoulli(k_adj, 0.15, (G, N, N)).astype(jnp.float32)
    adj = adj * (1.0 - jnp.eye(N, dtype=jnp.float32))       # no self loops
    deg = jnp.sum(adj, axis=-1, keepdims=True)
    a_mean = adj / jnp.maximum(deg, 1.0)

    x = jax.random.normal(k_x, (G, N, IN_FEATS), jnp.float32)
    params = make_params(k_p, IN_FEATS, N_HIDDEN, N_CLASSES)
    packed = prepare_sage_params(params)       # one-time weight packing

    out = sage_forward(a_mean, x, packed, N_CLASSES)
    out = jax.block_until_ready(out)
    assert out.shape == (G, N, N_CLASSES)

    # Loose tolerance: matmul operands are bf16 (fp32 accumulation).
    ref = sage_reference(a_mean, x, params)
    err = float(jnp.max(jnp.abs(out - ref)))
    scale = float(jnp.max(jnp.abs(ref)))
    assert err <= 0.05 * scale + 0.05, f"mismatch: max|err|={err}, max|ref|={scale}"

    print("KERNEL_OK")
</pallas_src>

<mosaic_0001>
module attributes {stable_mosaic.version = 11 : i64} {
  func.func @_sage3_fused_kernel(%arg0: i32, %arg1: memref<1x64x64xf32, #tpu.memory_space<vmem>>, %arg2: memref<1x64x32xf32, #tpu.memory_space<vmem>>, %arg3: memref<64x32xbf16, #tpu.memory_space<vmem>>, %arg4: memref<1x32xf32, #tpu.memory_space<vmem>>, %arg5: memref<64x32xbf16, #tpu.memory_space<vmem>>, %arg6: memref<1x32xf32, #tpu.memory_space<vmem>>, %arg7: memref<64x128xbf16, #tpu.memory_space<vmem>>, %arg8: memref<1x128xf32, #tpu.memory_space<vmem>>, %arg9: memref<1x64x128xf32, #tpu.memory_space<vmem>>) attributes {dimension_semantics = [#tpu.dimension_semantics<parallel>], iteration_bounds = array<i64: 4>, scalar_prefetch = 0 : i64, scratch_operands = 0 : i64, tpu.core_type = #tpu.core_type<tc>, window_params = [{transform_indices = @transform_0, window_bounds = array<i64: 1, 64, 64>}, {transform_indices = @transform_1, window_bounds = array<i64: 1, 64, 32>}, {pipeline_mode = #tpu.pipeline_mode<synchronous>, transform_indices = @transform_2, window_bounds = array<i64: 64, 32>}, {pipeline_mode = #tpu.pipeline_mode<synchronous>, transform_indices = @transform_3, window_bounds = array<i64: 1, 32>}, {pipeline_mode = #tpu.pipeline_mode<synchronous>, transform_indices = @transform_4, window_bounds = array<i64: 64, 32>}, {pipeline_mode = #tpu.pipeline_mode<synchronous>, transform_indices = @transform_5, window_bounds = array<i64: 1, 32>}, {pipeline_mode = #tpu.pipeline_mode<synchronous>, transform_indices = @transform_6, window_bounds = array<i64: 64, 128>}, {pipeline_mode = #tpu.pipeline_mode<synchronous>, transform_indices = @transform_7, window_bounds = array<i64: 1, 128>}, {transform_indices = @transform_8, window_bounds = array<i64: 1, 64, 128>}]} {
    %c0 = arith.constant 0 : index
    %c0_0 = arith.constant 0 : index
    %c0_1 = arith.constant 0 : index
    %0 = vector.load %arg1[%c0, %c0_0, %c0_1] : memref<1x64x64xf32, #tpu.memory_space<vmem>>, vector<1x64x64xf32>
    %1 = vector.shape_cast %0 : vector<1x64x64xf32> to vector<64x64xf32>
    %2 = arith.truncf %1 : vector<64x64xf32> to vector<64x64xbf16>
    %c0_2 = arith.constant 0 : index
    %c0_3 = arith.constant 0 : index
    %c0_4 = arith.constant 0 : index
    %3 = vector.load %arg2[%c0_2, %c0_3, %c0_4] : memref<1x64x32xf32, #tpu.memory_space<vmem>>, vector<1x64x32xf32>
    %4 = vector.shape_cast %3 : vector<1x64x32xf32> to vector<64x32xf32>
    %5 = arith.truncf %4 : vector<64x32xf32> to vector<64x32xbf16>
    %cst = arith.constant dense<0.000000e+00> : vector<64x32xf32>
    %6 = tpu.matmul %2, %5, %cst {dimension_numbers = #tpu.dot_dimension_numbers<[1], [0], [0], [1], [0, 0, 1, 1], [], []>} : vector<64x64xbf16>, vector<64x32xbf16>, vector<64x32xf32> -> vector<64x32xf32>
    %7 = arith.truncf %6 : vector<64x32xf32> to vector<64x32xbf16>
    %8 = tpu.concatenate %5, %7 in 1 : vector<64x32xbf16>, vector<64x32xbf16> -> vector<64x64xbf16>
    %c0_5 = arith.constant 0 : index
    %c0_6 = arith.constant 0 : index
    %9 = vector.load %arg3[%c0_5, %c0_6] : memref<64x32xbf16, #tpu.memory_space<vmem>>, vector<64x32xbf16>
    %cst_7 = arith.constant dense<0.000000e+00> : vector<64x32xf32>
    %10 = tpu.matmul %8, %9, %cst_7 {dimension_numbers = #tpu.dot_dimension_numbers<[1], [0], [0], [1], [0, 0, 1, 1], [], []>} : vector<64x64xbf16>, vector<64x32xbf16>, vector<64x32xf32> -> vector<64x32xf32>
    %c0_8 = arith.constant 0 : index
    %c0_9 = arith.constant 0 : index
    %11 = vector.load %arg4[%c0_8, %c0_9] : memref<1x32xf32, #tpu.memory_space<vmem>>, vector<1x32xf32>
    %12 = vector.broadcast %11 : vector<1x32xf32> to vector<64x32xf32>
    %13 = arith.addf %10, %12 : vector<64x32xf32>
    %cst_10 = arith.constant 0.000000e+00 : f32
    %14 = vector.broadcast %cst_10 : f32 to vector<64x32xf32>
    %15 = arith.maximumf %13, %14 : vector<64x32xf32>
    %16 = arith.truncf %15 : vector<64x32xf32> to vector<64x32xbf16>
    %cst_11 = arith.constant dense<0.000000e+00> : vector<64x32xf32>
    %17 = tpu.matmul %2, %16, %cst_11 {dimension_numbers = #tpu.dot_dimension_numbers<[1], [0], [0], [1], [0, 0, 1, 1], [], []>} : vector<64x64xbf16>, vector<64x32xbf16>, vector<64x32xf32> -> vector<64x32xf32>
    %18 = arith.truncf %17 : vector<64x32xf32> to vector<64x32xbf16>
    %19 = tpu.concatenate %16, %18 in 1 : vector<64x32xbf16>, vector<64x32xbf16> -> vector<64x64xbf16>
    %c0_12 = arith.constant 0 : index
    %c0_13 = arith.constant 0 : index
    %20 = vector.load %arg5[%c0_12, %c0_13] : memref<64x32xbf16, #tpu.memory_space<vmem>>, vector<64x32xbf16>
    %cst_14 = arith.constant dense<0.000000e+00> : vector<64x32xf32>
    %21 = tpu.matmul %19, %20, %cst_14 {dimension_numbers = #tpu.dot_dimension_numbers<[1], [0], [0], [1], [0, 0, 1, 1], [], []>} : vector<64x64xbf16>, vector<64x32xbf16>, vector<64x32xf32> -> vector<64x32xf32>
    %c0_15 = arith.constant 0 : index
    %c0_16 = arith.constant 0 : index
    %22 = vector.load %arg6[%c0_15, %c0_16] : memref<1x32xf32, #tpu.memory_space<vmem>>, vector<1x32xf32>
    %23 = vector.broadcast %22 : vector<1x32xf32> to vector<64x32xf32>
    %24 = arith.addf %21, %23 : vector<64x32xf32>
    %cst_17 = arith.constant 0.000000e+00 : f32
    %25 = vector.broadcast %cst_17 : f32 to vector<64x32xf32>
    %26 = arith.maximumf %24, %25 : vector<64x32xf32>
    %27 = arith.truncf %26 : vector<64x32xf32> to vector<64x32xbf16>
    %cst_18 = arith.constant dense<0.000000e+00> : vector<64x32xf32>
    %28 = tpu.matmul %2, %27, %cst_18 {dimension_numbers = #tpu.dot_dimension_numbers<[1], [0], [0], [1], [0, 0, 1, 1], [], []>} : vector<64x64xbf16>, vector<64x32xbf16>, vector<64x32xf32> -> vector<64x32xf32>
    %29 = arith.truncf %28 : vector<64x32xf32> to vector<64x32xbf16>
    %30 = tpu.concatenate %27, %29 in 1 : vector<64x32xbf16>, vector<64x32xbf16> -> vector<64x64xbf16>
    %c0_19 = arith.constant 0 : index
    %c0_20 = arith.constant 0 : index
    %31 = vector.load %arg7[%c0_19, %c0_20] : memref<64x128xbf16, #tpu.memory_space<vmem>>, vector<64x128xbf16>
    %cst_21 = arith.constant dense<0.000000e+00> : vector<64x128xf32>
    %32 = tpu.matmul %30, %31, %cst_21 {dimension_numbers = #tpu.dot_dimension_numbers<[1], [0], [0], [1], [0, 0, 1, 1], [], []>} : vector<64x64xbf16>, vector<64x128xbf16>, vector<64x128xf32> -> vector<64x128xf32>
    %c0_22 = arith.constant 0 : index
    %c0_23 = arith.constant 0 : index
    %33 = vector.load %arg8[%c0_22, %c0_23] : memref<1x128xf32, #tpu.memory_space<vmem>>, vector<1x128xf32>
    %34 = vector.broadcast %33 : vector<1x128xf32> to vector<64x128xf32>
    %35 = arith.addf %32, %34 : vector<64x128xf32>
    %c0_24 = arith.constant 0 : index
    %c0_25 = arith.constant 0 : index
    %c0_26 = arith.constant 0 : index
    %36 = vector.load %arg9[%c0_24, %c0_25, %c0_26] : memref<1x64x128xf32, #tpu.memory_space<vmem>>, vector<1x64x128xf32>
    %37 = vector.shape_cast %36 : vector<1x64x128xf32> to vector<64x128xf32>
    %38 = vector.shape_cast %35 : vector<64x128xf32> to vector<1x64x128xf32>
    tpu.vector_store %arg9[%c0_24, %c0_25, %c0_26], %38 {strides = array<i32>} : memref<1x64x128xf32, #tpu.memory_space<vmem>>, vector<1x64x128xf32>,
    return
  }
  func.func @transform_0(%arg0: i32) -> (i32, i32, i32) {
    %c0_i32 = arith.constant 0 : i32
    %c0_i32_0 = arith.constant 0 : i32
    %c0_i32_1 = arith.constant 0 : i32
    return %arg0, %c0_i32, %c0_i32_0 : i32, i32, i32
  }
  func.func @transform_1(%arg0: i32) -> (i32, i32, i32) {
    %c0_i32 = arith.constant 0 : i32
    %c0_i32_0 = arith.constant 0 : i32
    %c0_i32_1 = arith.constant 0 : i32
    return %arg0, %c0_i32, %c0_i32_0 : i32, i32, i32
  }
  func.func @transform_2(%arg0: i32) -> (i32, i32) {
    %c0_i32 = arith.constant 0 : i32
    %c0_i32_0 = arith.constant 0 : i32
    %c0_i32_1 = arith.constant 0 : i32
    return %c0_i32, %c0_i32_0 : i32, i32
  }
  func.func @transform_3(%arg0: i32) -> (i32, i32) {
    %c0_i32 = arith.constant 0 : i32
    %c0_i32_0 = arith.constant 0 : i32
    %c0_i32_1 = arith.constant 0 : i32
    return %c0_i32, %c0_i32_0 : i32, i32
  }
  func.func @transform_4(%arg0: i32) -> (i32, i32) {
    %c0_i32 = arith.constant 0 : i32
    %c0_i32_0 = arith.constant 0 : i32
    %c0_i32_1 = arith.constant 0 : i32
    return %c0_i32, %c0_i32_0 : i32, i32
  }
  func.func @transform_5(%arg0: i32) -> (i32, i32) {
    %c0_i32 = arith.constant 0 : i32
    %c0_i32_0 = arith.constant 0 : i32
    %c0_i32_1 = arith.constant 0 : i32
    return %c0_i32, %c0_i32_0 : i32, i32
  }
  func.func @transform_6(%arg0: i32) -> (i32, i32) {
    %c0_i32 = arith.constant 0 : i32
    %c0_i32_0 = arith.constant 0 : i32
    %c0_i32_1 = arith.constant 0 : i32
    return %c0_i32, %c0_i32_0 : i32, i32
  }
  func.func @transform_7(%arg0: i32) -> (i32, i32) {
    %c0_i32 = arith.constant 0 : i32
    %c0_i32_0 = arith.constant 0 : i32
    %c0_i32_1 = arith.constant 0 : i32
    return %c0_i32, %c0_i32_0 : i32, i32
  }
  func.func @transform_8(%arg0: i32) -> (i32, i32, i32) {
    %c0_i32 = arith.constant 0 : i32
    %c0_i32_0 = arith.constant 0 : i32
    %c0_i32_1 = arith.constant 0 : i32
    return %arg0, %c0_i32, %c0_i32_0 : i32, i32, i32
  }
}

</mosaic_0001>

<llo_original>
// kernel: tpu_custom_call.1
$region0: #{tpu_custom_call.1}
  #allocation0 [shape = 'u32[]', space=smem, size = 0x4, offset = 0x4, fixed_abs, tag = 'smem constant byte address 0x4 - core index']
  #allocation1 [shape = 'u32[144,128]{1,0:T(1,128)}', space=vmem, size = 0x12000, scoped, tag = 'internal scratch']
  %s0 = inlined_call_operand.vmem [shape: f32[4,64,64], index: 0, kind: input, shape index: {}]
  %s1 = inlined_call_operand.vmem [shape: f32[4,64,32], index: 1, kind: input, shape index: {}]
  %s2 = inlined_call_operand.vmem [shape: bf16[64,32], index: 2, kind: input, shape index: {}]
  %s3 = inlined_call_operand.vmem [shape: f32[1,32], index: 3, kind: input, shape index: {}]
  %s4 = inlined_call_operand.vmem [shape: bf16[64,32], index: 4, kind: input, shape index: {}]
  %s5 = inlined_call_operand.vmem [shape: f32[1,32], index: 5, kind: input, shape index: {}]
  %s6 = inlined_call_operand.vmem [shape: bf16[64,128], index: 6, kind: input, shape index: {}]
  %s7 = inlined_call_operand.vmem [shape: f32[1,128], index: 7, kind: input, shape index: {}]
  %s8 = inlined_call_operand.hbm [shape: f32[4,64,128], index: 8, kind: output, shape index: {}]
  %s9 = sld [smem:[#allocation0]]
  $region65: #{tpu_custom_call.1} parent=0
    _
  %s11 = ssub.s32 1, %s9
  %s12 = scalar_select 0, %s11, %s9
  $region1: #{tpu_custom_call.1} parent=0
    #allocation2 [shape = 'u8[65536]{0}', space=vmem, size = 0x10000, scoped, tag = 'output window, operand 0']
    #allocation3 [shape = 's32[2]{0}', space=sflag, size = 0x8, scoped, tag = 'scoped memory for tpu_custom_call.1']
    %13 = vsyncpa [#allocation3], 0
    %s14 = scalar_lea.sflag [#allocation3], 1
    %15 = vsyncpa %s14, 0
    loop: start=0, step=1, limit=6
    $region2: #{tpu_custom_call.1} parent=1 // loop_pre_header
      _
    $region3: #{tpu_custom_call.1} parent=1 // loop_header
      %s17 = sphi 0, %s21
      %p18 = scmp.ge.s32.totalorder %s17, 6
      %s27 = sphi 0, %s29
      %s30 = sphi 0, %s27
      %s31 = sphi 0, %s30
      %s47 = sphi 0, %s31
      %s53 = sphi 0, %s55
      %s56 = sphi 0, %s53
      %s57 = sphi 0, %s56
      %s73 = sphi 0, %s57
      %s77 = sphi 0, %s77
      %s79 = sphi 0, %s77
      %s80 = sphi 0, %s79
      %s94 = sphi 0, %s80
      %s98 = sphi 0, %s98
      %s100 = sphi 0, %s98
      %s101 = sphi 0, %s100
      %s115 = sphi 0, %s101
      %s119 = sphi 0, %s119
      %s121 = sphi 0, %s119
      %s122 = sphi 0, %s121
      %s136 = sphi 0, %s122
      %s140 = sphi 0, %s140
      %s142 = sphi 0, %s140
      %s143 = sphi 0, %s142
      %s157 = sphi 0, %s143
      %s161 = sphi 0, %s161
      %s163 = sphi 0, %s161
      %s164 = sphi 0, %s163
      %s178 = sphi 0, %s164
      %s182 = sphi 0, %s182
      %s184 = sphi 0, %s182
      %s185 = sphi 0, %s184
      %s199 = sphi 0, %s185
      %s205 = sphi 0, %s207
      %s208 = sphi 0, %s205
      %s209 = sphi 0, %s208
      %s225 = sphi 0, %s209
    $region4: #{tpu_custom_call.1} parent=1 // loop_header_branch
      %20 = sbr.rel (%p18) target = $region8
    $region5: #{tpu_custom_call.1} parent=1 // loop_body
      %s22 = ssub.s32 %s17, 1
      %s23 = ssub.s32 %s17, 2
      %s24 = sadd.s32 %s17, 1
      %s25 = ssub.s32 %s17, %s24
      %p26 = scmp.eq.s32.totalorder %s25, 0
      %s28 = sadd.s32 %s27, 1
      %s29 = scalar_select %p26, %s27, %s28
      %p32 = pneg %p26
      %p33 = scmp.eq.s32.totalorder %s17, 3
      %p34 = por %p32, %p33
      %p35 = scmp.ne.s32.totalorder %s27, %s30
      %p36 = scmp.eq.s32.totalorder %s17, 0
      %p37 = por %p35, %p36
      %p38 = scmp.ne.s32.totalorder %s27, %s30
      %p39 = scmp.eq.s32.totalorder %s22, 3
      %p40 = por %p38, %p39
      %p41 = scmp.ne.s32.totalorder %s30, %s31
      %p42 = scmp.eq.s32.totalorder %s22, 0
      %p43 = por %p41, %p42
      %p44 = scmp.ne.s32.totalorder %s30, %s31
      %p45 = scmp.eq.s32.totalorder %s23, 3
      %p46 = por %p44, %p45
      %p48 = scmp.ne.s32.totalorder %s31, %s47
      %p49 = scmp.eq.s32.totalorder %s23, 0
      %p50 = por %p48, %p49
      %s51 = ssub.s32 %s17, %s24
      %p52 = scmp.eq.s32.totalorder %s51, 0
      %s54 = sadd.s32 %s53, 1
      %s55 = scalar_select %p52, %s53, %s54
      %p58 = pneg %p52
      %p59 = scmp.eq.s32.totalorder %s17, 3
      %p60 = por %p58, %p59
      %p61 = scmp.ne.s32.totalorder %s53, %s56
      %p62 = scmp.eq.s32.totalorder %s17, 0
      %p63 = por %p61, %p62
      %p64 = scmp.ne.s32.totalorder %s53, %s56
      %p65 = scmp.eq.s32.totalorder %s22, 3
      %p66 = por %p64, %p65
      %p67 = scmp.ne.s32.totalorder %s56, %s57
      %p68 = scmp.eq.s32.totalorder %s22, 0
      %p69 = por %p67, %p68
      %p70 = scmp.ne.s32.totalorder %s56, %s57
      %p71 = scmp.eq.s32.totalorder %s23, 3
      %p72 = por %p70, %p71
      %p74 = scmp.ne.s32.totalorder %s57, %s73
      %p75 = scmp.eq.s32.totalorder %s23, 0
      %p76 = por %p74, %p75
      %s78 = sadd.s32 %s77, 1
      %p81 = scmp.eq.s32.totalorder %s17, 3
      %p82 = scmp.ne.s32.totalorder %s77, %s79
      %p83 = scmp.eq.s32.totalorder %s17, 0
      %p84 = por %p82, %p83
      %p85 = scmp.ne.s32.totalorder %s77, %s79
      %p86 = scmp.eq.s32.totalorder %s22, 3
      %p87 = por %p85, %p86
      %p88 = scmp.ne.s32.totalorder %s79, %s80
      %p89 = scmp.eq.s32.totalorder %s22, 0
      %p90 = por %p88, %p89
      %p91 = scmp.ne.s32.totalorder %s79, %s80
      %p92 = scmp.eq.s32.totalorder %s23, 3
      %p93 = por %p91, %p92
      %p95 = scmp.ne.s32.totalorder %s80, %s94
      %p96 = scmp.eq.s32.totalorder %s23, 0
      %p97 = por %p95, %p96
      %s99 = sadd.s32 %s98, 1
      %p102 = scmp.eq.s32.totalorder %s17, 3
      %p103 = scmp.ne.s32.totalorder %s98, %s100
      %p104 = scmp.eq.s32.totalorder %s17, 0
      %p105 = por %p103, %p104
      %p106 = scmp.ne.s32.totalorder %s98, %s100
      %p107 = scmp.eq.s32.totalorder %s22, 3
      %p108 = por %p106, %p107
      %p109 = scmp.ne.s32.totalorder %s100, %s101
      %p110 = scmp.eq.s32.totalorder %s22, 0
      %p111 = por %p109, %p110
      %p112 = scmp.ne.s32.totalorder %s100, %s101
      %p113 = scmp.eq.s32.totalorder %s23, 3
      %p114 = por %p112, %p113
      %p116 = scmp.ne.s32.totalorder %s101, %s115
      %p117 = scmp.eq.s32.totalorder %s23, 0
      %p118 = por %p116, %p117
      %s120 = sadd.s32 %s119, 1
      %p123 = scmp.eq.s32.totalorder %s17, 3
      %p124 = scmp.ne.s32.totalorder %s119, %s121
      %p125 = scmp.eq.s32.totalorder %s17, 0
      %p126 = por %p124, %p125
      %p127 = scmp.ne.s32.totalorder %s119, %s121
      %p128 = scmp.eq.s32.totalorder %s22, 3
      %p129 = por %p127, %p128
      %p130 = scmp.ne.s32.totalorder %s121, %s122
      %p131 = scmp.eq.s32.totalorder %s22, 0
      %p132 = por %p130, %p131
      %p133 = scmp.ne.s32.totalorder %s121, %s122
      %p134 = scmp.eq.s32.totalorder %s23, 3
      %p135 = por %p133, %p134
      %p137 = scmp.ne.s32.totalorder %s122, %s136
      %p138 = scmp.eq.s32.totalorder %s23, 0
      %p139 = por %p137, %p138
      %s141 = sadd.s32 %s140, 1
      %p144 = scmp.eq.s32.totalorder %s17, 3
      %p145 = scmp.ne.s32.totalorder %s140, %s142
      %p146 = scmp.eq.s32.totalorder %s17, 0
      %p147 = por %p145, %p146
      %p148 = scmp.ne.s32.totalorder %s140, %s142
      %p149 = scmp.eq.s32.totalorder %s22, 3
      %p150 = por %p148, %p149
      %p151 = scmp.ne.s32.totalorder %s142, %s143
      %p152 = scmp.eq.s32.totalorder %s22, 0
      %p153 = por %p151, %p152
      %p154 = scmp.ne.s32.totalorder %s142, %s143
      %p155 = scmp.eq.s32.totalorder %s23, 3
      %p156 = por %p154, %p155
      %p158 = scmp.ne.s32.totalorder %s143, %s157
      %p159 = scmp.eq.s32.totalorder %s23, 0
      %p160 = por %p158, %p159
      %s162 = sadd.s32 %s161, 1
      %p165 = scmp.eq.s32.totalorder %s17, 3
      %p166 = scmp.ne.s32.totalorder %s161, %s163
      %p167 = scmp.eq.s32.totalorder %s17, 0
      %p168 = por %p166, %p167
      %p169 = scmp.ne.s32.totalorder %s161, %s163
      %p170 = scmp.eq.s32.totalorder %s22, 3
      %p171 = por %p169, %p170
      %p172 = scmp.ne.s32.totalorder %s163, %s164
      %p173 = scmp.eq.s32.totalorder %s22, 0
      %p174 = por %p172, %p173
      %p175 = scmp.ne.s32.totalorder %s163, %s164
      %p176 = scmp.eq.s32.totalorder %s23, 3
      %p177 = por %p175, %p176
      %p179 = scmp.ne.s32.totalorder %s164, %s178
      %p180 = scmp.eq.s32.totalorder %s23, 0
      %p181 = por %p179, %p180
      %s183 = sadd.s32 %s182, 1
      %p186 = scmp.eq.s32.totalorder %s17, 3
      %p187 = scmp.ne.s32.totalorder %s182, %s184
      %p188 = scmp.eq.s32.totalorder %s17, 0
      %p189 = por %p187, %p188
      %p190 = scmp.ne.s32.totalorder %s182, %s184
      %p191 = scmp.eq.s32.totalorder %s22, 3
      %p192 = por %p190, %p191
      %p193 = scmp.ne.s32.totalorder %s184, %s185
      %p194 = scmp.eq.s32.totalorder %s22, 0
      %p195 = por %p193, %p194
      %p196 = scmp.ne.s32.totalorder %s184, %s185
      %p197 = scmp.eq.s32.totalorder %s23, 3
      %p198 = por %p196, %p197
      %p200 = scmp.ne.s32.totalorder %s185, %s199
      %p201 = scmp.eq.s32.totalorder %s23, 0
      %p202 = por %p200, %p201
      %s203 = ssub.s32 %s17, %s24
      %p204 = scmp.eq.s32.totalorder %s203, 0
      %s206 = sadd.s32 %s205, 1
      %s207 = scalar_select %p204, %s205, %s206
      %p210 = pneg %p204
      %p211 = scmp.eq.s32.totalorder %s17, 3
      %p212 = por %p210, %p211
      %p213 = scmp.ne.s32.totalorder %s205, %s208
      %p214 = scmp.eq.s32.totalorder %s17, 0
      %p215 = por %p213, %p214
      %p216 = scmp.ne.s32.totalorder %s205, %s208
      %p217 = scmp.eq.s32.totalorder %s22, 3
      %p218 = por %p216, %p217
      %p219 = scmp.ne.s32.totalorder %s208, %s209
      %p220 = scmp.eq.s32.totalorder %s22, 0
      %p221 = por %p219, %p220
      %p222 = scmp.ne.s32.totalorder %s208, %s209
      %p223 = scmp.eq.s32.totalorder %s23, 3
      %p224 = por %p222, %p223
      %p226 = scmp.ne.s32.totalorder %s209, %s225
      %p227 = scmp.eq.s32.totalorder %s23, 0
      %p228 = por %p226, %p227
      %p229 = scmp.le.s32.totalorder 1, %s17
      %p230 = scmp.lt.s32.totalorder %s17, 5
      %p231 = pnand %p229, %p230
      %p232 = pneg %p231
      // Predicated region
      $region9: #{tpu_custom_call.1} parent=5 // pred_check
        _
      $region10: #{tpu_custom_call.1} parent=5 // pred_check_branch
        %234 = sbr.rel (%p231) target = $region12
      $region11: #{tpu_custom_call.1} parent=5 // pred_region
        %s235 = ssub.s32 %s17, 1
        // Predicated region
        $region13: #{tpu_custom_call.1} parent=11 // pred_check
          %p236 = pneg %p90
        $region14: #{tpu_custom_call.1} parent=11 // pred_check_branch
          %238 = sbr.rel (%p236) target = $region16
        $region15: #{tpu_custom_call.1} parent=11 // pred_region
          _
        $region16: #{tpu_custom_call.1} parent=11 // pred_fallthru
          _
        // Predicated region
        $region17: #{tpu_custom_call.1} parent=11 // pred_check
          %p239 = pneg %p111
        $region18: #{tpu_custom_call.1} parent=11 // pred_check_branch
          %241 = sbr.rel (%p239) target = $region20
        $region19: #{tpu_custom_call.1} parent=11 // pred_region
          _
        $region20: #{tpu_custom_call.1} parent=11 // pred_fallthru
          _
        // Predicated region
        $region21: #{tpu_custom_call.1} parent=11 // pred_check
          %p242 = pneg %p132
        $region22: #{tpu_custom_call.1} parent=11 // pred_check_branch
          %244 = sbr.rel (%p242) target = $region24
        $region23: #{tpu_custom_call.1} parent=11 // pred_region
          _
        $region24: #{tpu_custom_call.1} parent=11 // pred_fallthru
          _
        // Predicated region
        $region25: #{tpu_custom_call.1} parent=11 // pred_check
          %p245 = pneg %p153
        $region26: #{tpu_custom_call.1} parent=11 // pred_check_branch
          %247 = sbr.rel (%p245) target = $region28
        $region27: #{tpu_custom_call.1} parent=11 // pred_region
          _
        $region28: #{tpu_custom_call.1} parent=11 // pred_fallthru
          _
        // Predicated region
        $region29: #{tpu_custom_call.1} parent=11 // pred_check
          %p248 = pneg %p174
        $region30: #{tpu_custom_call.1} parent=11 // pred_check_branch
          %250 = sbr.rel (%p248) target = $region32
        $region31: #{tpu_custom_call.1} parent=11 // pred_region
          _
        $region32: #{tpu_custom_call.1} parent=11 // pred_fallthru
          _
        // Predicated region
        $region33: #{tpu_custom_call.1} parent=11 // pred_check
          %p251 = pneg %p195
        $region34: #{tpu_custom_call.1} parent=11 // pred_check_branch
          %253 = sbr.rel (%p251) target = $region36
        $region35: #{tpu_custom_call.1} parent=11 // pred_region
          _
        $region36: #{tpu_custom_call.1} parent=11 // pred_fallthru
          _
      $region12: #{tpu_custom_call.1} parent=5 // pred_fallthru
        _
      %p254 = scmp.lt.s32.totalorder %s17, 4
      // Predicated region
      $region37: #{tpu_custom_call.1} parent=5 // pred_check
        %p255 = pneg %p254
      $region38: #{tpu_custom_call.1} parent=5 // pred_check_branch
        %257 = sbr.rel (%p255) target = $region40
      $region39: #{tpu_custom_call.1} parent=5 // pred_region
        // Predicated region
        $region41: #{tpu_custom_call.1} parent=39 // pred_check
          %p258 = pneg %p37
        $region42: #{tpu_custom_call.1} parent=39 // pred_check_branch
          %260 = sbr.rel (%p258) target = $region44
        $region43: #{tpu_custom_call.1} parent=39 // pred_region
          %p261 = scmp.lt.s32.totalorder %s17, 3
          %s262 = scalar_select %p261, %s17, 3
          %s263 = smul.addr %s262, 8
          %s264 = smul.addr %s263, 8
          %s265 = scalar_lea.vmem %s0, %s264
        $region44: #{tpu_custom_call.1} parent=39 // pred_fallthru
          _
        // Predicated region
        $region45: #{tpu_custom_call.1} parent=39 // pred_check
          %p266 = pneg %p63
        $region46: #{tpu_custom_call.1} parent=39 // pred_check_branch
          %268 = sbr.rel (%p266) target = $region48
        $region47: #{tpu_custom_call.1} parent=39 // pred_region
          %p269 = scmp.lt.s32.totalorder %s17, 3
          %s270 = scalar_select %p269, %s17, 3
          %s271 = smul.addr %s270, 8
          %s272 = smul.addr %s271, 8
          %s273 = scalar_lea.vmem %s1, %s272
        $region48: #{tpu_custom_call.1} parent=39 // pred_fallthru
          _
      $region40: #{tpu_custom_call.1} parent=5 // pred_fallthru
        _
      %p274 = scmp.le.s32.totalorder 1, %s17
      %p275 = scmp.lt.s32.totalorder %s17, 5
      %p276 = pnand %p274, %p275
      %p277 = pneg %p276
      // Predicated region
      $region49: #{tpu_custom_call.1} parent=5 // pred_check
        _
      $region50: #{tpu_custom_call.1} parent=5 // pred_check_branch
        %279 = sbr.rel (%p276) target = $region52
      $region51: #{tpu_custom_call.1} parent=5 // pred_region
        %s280 = ssub.s32 %s17, 1
        %p281 = scmp.lt.s32.totalorder %s22, 3
        %s282 = scalar_select %p281, %s22, 3
        %s283 = smul.addr %s282, 8
        %s284 = smul.addr %s283, 8
        %s285 = scalar_lea.vmem %s0, %s284
        %p286 = pneg %p43
        %p287 = pneg %p40
        %p288 = scmp.lt.s32.totalorder %s22, 3
        %s289 = scalar_select %p288, %s22, 3
        %s290 = smul.addr %s289, 8
        %s291 = smul.addr %s290, 8
        %s292 = scalar_lea.vmem %s1, %s291
        %p293 = pneg %p69
        %p294 = pneg %p66
        %p295 = pneg %p90
        %p296 = pneg %p87
        %p297 = pneg %p111
        %p298 = pneg %p108
        %p299 = pneg %p132
        %p300 = pneg %p129
        %p301 = pneg %p153
        %p302 = pneg %p150
        %p303 = pneg %p174
        %p304 = pneg %p171
        %p305 = pneg %p195
        %p306 = pneg %p192
        %p307 = pneg %p221
        %p308 = pneg %p218
        %s309 = sand.u32 %s208, 1
        %s310 = scalar_lea.sflag [#allocation3], %s309
        %s311 = sand.u32 %s208, 1
        %s312 = smul.addr %s311, 64
        %s313 = scalar_lea.vmem [#allocation2], %s312
        %p314 = scmp.lt.s32.totalorder %s22, 3
        %s315 = scalar_select %p314, %s22, 3
        %s316 = smul.addr %s315, 8
        %s317 = smul.addr %s316, 8
        %s318 = scalar_lea.vmem %s0, %s317
        %p319 = scmp.lt.s32.totalorder %s22, 3
        %s320 = scalar_select %p319, %s22, 3
        %s321 = smul.addr %s320, 8
        %s322 = smul.addr %s321, 8
        %s323 = scalar_lea.vmem %s1, %s322
        %v325 = vld [vmem:[%s318] sm:$0xff]
        %v326 = vld [vmem:[%s318 + $0x8] sm:$0xff]
        %v327 = vld [vmem:[%s318 + $0x10] sm:$0xff]
        %v328 = vld [vmem:[%s318 + $0x18] sm:$0xff]
        %v329 = vld [vmem:[%s318 + $0x20] sm:$0xff]
        %v330 = vld [vmem:[%s318 + $0x28] sm:$0xff]
        %v331 = vld [vmem:[%s318 + $0x30] sm:$0xff]
        %v332 = vld [vmem:[%s318 + $0x38] sm:$0xff]
        %v333 = vpack.c.bf16 %v326, %v325
        %v334 = vpack.c.bf16 %v328, %v327
        %v335 = vpack.c.bf16 %v330, %v329
        %v336 = vpack.c.bf16 %v332, %v331
        %v337 = vld [vmem:[%s323] sm:$0xff]
        %v338 = vld [vmem:[%s323 + $0x8] sm:$0xff]
        %v339 = vld [vmem:[%s323 + $0x10] sm:$0xff]
        %v340 = vld [vmem:[%s323 + $0x18] sm:$0xff]
        %v341 = vld [vmem:[%s323 + $0x20] sm:$0xff]
        %v342 = vld [vmem:[%s323 + $0x28] sm:$0xff]
        %v343 = vld [vmem:[%s323 + $0x30] sm:$0xff]
        %v344 = vld [vmem:[%s323 + $0x38] sm:$0xff]
        %v345 = vpack.c.bf16 %v338, %v337
        %v346 = vpack.c.bf16 %v340, %v339
        %v347 = vpack.c.bf16 %v342, %v341
        %v348 = vpack.c.bf16 %v344, %v343
        %vm349 = vcmask 523264
        %v351 = vsel %vm349, %v333, 0
        %v354 = vsel %vm349, %v334, 0
        %v357 = vsel %vm349, %v335, 0
        %v360 = vsel %vm349, %v336, 0
        %362 = vmatprep.subr.bf16.mxu0 0
        %363 = vmatpush1.bf16.msra.mxu0 %v345
        %364 = vmatprep.subr.bf16.mxu0 0
        %365 = vmatpush1.bf16.msra.mxu0 %v346
        %366 = vmatprep.subr.bf16.mxu0 0
        %367 = vmatpush1.bf16.msra.mxu0 %v347
        %368 = vmatprep.subr.bf16.mxu0 0
        %369 = vmatpush1.bf16.msra.mxu0 %v348
        %370 = vmatprep.subr.bf16.mxu0 0
        %371 = vmatpush1.bf16.msra.mxu0 0
        %372 = vmatprep.subr.bf16.mxu0 0
        %373 = vmatpush1.bf16.msra.mxu0 0
        %374 = vmatprep.subr.bf16.mxu0 0
        %375 = vmatpush1.bf16.msra.mxu0 0
        %376 = vmatprep.subr.bf16.mxu0 0
        %377 = vmatpush1.bf16.msra.mxu0 0
        %378 = vmatprep.subr.bf16.mxu0 0
        %379 = vmatpush1.bf16.msra.mxu0 0
        %380 = vmatprep.subr.bf16.mxu0 0
        %381 = vmatpush1.bf16.msra.mxu0 0
        %382 = vmatprep.subr.bf16.mxu0 0
        %383 = vmatpush1.bf16.msra.mxu0 0
        %384 = vmatprep.subr.bf16.mxu0 0
        %385 = vmatpush1.bf16.msra.mxu0 0
        %386 = vmatprep.subr.bf16.mxu0 0
        %387 = vmatpush1.bf16.msra.mxu0 0
        %388 = vmatprep.subr.bf16.mxu0 0
        %389 = vmatpush1.bf16.msra.mxu0 0
        %390 = vmatprep.subr.bf16.mxu0 0
        %391 = vmatpush1.bf16.msra.mxu0 0
        %392 = vmatprep.subr.bf16.mxu0 0
        %393 = vmatpush1.bf16.msra.mxu0 0
        %394 = vmatprep.mubr.bf16.mxu0 0
        %395 = vmatmul.mubr.bf16.gmra.mrb[0].mxu0 %v351
        %v396 = vpop.f32.mrb[0].mxu0
        %v397 = vadd.f32 0.0, %v396
        %v398 = vpop.f32.mrb[0].mxu0
        %v399 = vpop.f32.mrb[0].mxu0
        %v400 = vadd.f32 0.0, %v399
        %v401 = vpop.f32.mrb[0].mxu0
        %402 = vmatprep.mubr.bf16.mxu0 0
        %403 = vmatmul.mubr.bf16.gmra.mrb[0].mxu0 %v354
        %v404 = vpop.f32.mrb[0].mxu0
        %v405 = vadd.f32 0.0, %v404
        %v406 = vpop.f32.mrb[0].mxu0
        %v407 = vpop.f32.mrb[0].mxu0
        %v408 = vadd.f32 0.0, %v407
        %v409 = vpop.f32.mrb[0].mxu0
        %410 = vmatprep.mubr.bf16.mxu0 0
        %411 = vmatmul.mubr.bf16.gmra.mrb[0].mxu0 %v357
        %v412 = vpop.f32.mrb[0].mxu0
        %v413 = vadd.f32 0.0, %v412
        %v414 = vpop.f32.mrb[0].mxu0
        %v415 = vpop.f32.mrb[0].mxu0
        %v416 = vadd.f32 0.0, %v415
        %v417 = vpop.f32.mrb[0].mxu0
        %418 = vmatprep.mubr.bf16.mxu0 0
        %419 = vmatmul.mubr.bf16.gmra.mrb[0].mxu0 %v360
        %v420 = vpop.f32.mrb[0].mxu0
        %v421 = vadd.f32 0.0, %v420
        %v422 = vpop.f32.mrb[0].mxu0
        %v423 = vpop.f32.mrb[0].mxu0
        %v424 = vadd.f32 0.0, %v423
        %v425 = vpop.f32.mrb[0].mxu0
        %426 = vdwg.mxu0
        %v427 = vpack.c.bf16 %v400, %v397
        %v428 = vpack.c.bf16 %v408, %v405
        %v429 = vpack.c.bf16 %v416, %v413
        %v430 = vpack.c.bf16 %v424, %v421
        %435 = vrot.lane.b32.xlu0 %v427, 32
        %v436 = vpop.permute.xlu0 %435
        %437 = vrot.lane.b32.xlu0 %v428, 32
        %v438 = vpop.permute.xlu0 %437
        %439 = vrot.lane.b32.xlu0 %v429, 32
        %v440 = vpop.permute.xlu0 %439
        %441 = vrot.lane.b32.xlu0 %v430, 32
        %v442 = vpop.permute.xlu0 %441
        %vm443 = vcmask 261120
        %v446 = vsel %vm443, %v345, %v436
        %v449 = vsel %vm443, %v346, %v438
        %v452 = vsel %vm443, %v347, %v440
        %v455 = vsel %vm443, %v348, %v442
        %v456 = vld [vmem:[%s2] sm:$0xf]
        %v457 = vld [vmem:[%s2 + $0x4] sm:$0xf]
        %v458 = vld [vmem:[%s2 + $0x8] sm:$0xf]
        %v459 = vld [vmem:[%s2 + $0xc] sm:$0xf]
        %v460 = vld [vmem:[%s2 + $0x10] sm:$0xf]
        %v461 = vld [vmem:[%s2 + $0x14] sm:$0xf]
        %v462 = vld [vmem:[%s2 + $0x18] sm:$0xf]
        %v463 = vld [vmem:[%s2 + $0x1c] sm:$0xf]
        %v464 = vld [vmem:[%s3] sm:$0x1]
        %v466 = vlaneseq
        %v467 = vshrl.u32 %v466, 7
        %v468 = vsub.s32 0, %v467
        %v469 = vrot.slane %v464, %v468
        %v479 = vunpack.c.l.b16 %v456
        %v480 = vunpack.c.l.b16 %v457
        %v481 = vunpack.c.l.b16 %v458
        %v482 = vunpack.c.l.b16 %v459
        %v483 = vunpack.c.l.b16 %v460
        %v484 = vunpack.c.l.b16 %v461
        %v485 = vunpack.c.l.b16 %v462
        %v486 = vunpack.c.l.b16 %v463
        %v487 = vpack.c.b16 %v480, %v479
        %v488 = vpack.c.b16 %v482, %v481
        %v489 = vpack.c.b16 %v484, %v483
        %v490 = vpack.c.b16 %v486, %v485
        %v495 = vsel %vm349, %v446, 0
        %v497 = vsel %vm349, %v449, 0
        %v499 = vsel %vm349, %v452, 0
        %v501 = vsel %vm349, %v455, 0
        %503 = vmatprep.subr.bf16.mxu0 0
        %504 = vmatpush1.bf16.msra.mxu0 %v487
        %505 = vmatprep.subr.bf16.mxu0 0
        %506 = vmatpush1.bf16.msra.mxu0 %v488
        %507 = vmatprep.subr.bf16.mxu0 0
        %508 = vmatpush1.bf16.msra.mxu0 %v489
        %509 = vmatprep.subr.bf16.mxu0 0
        %510 = vmatpush1.bf16.msra.mxu0 %v490
        %511 = vmatprep.subr.bf16.mxu0 0
        %512 = vmatpush1.bf16.msra.mxu0 0
        %513 = vmatprep.subr.bf16.mxu0 0
        %514 = vmatpush1.bf16.msra.mxu0 0
        %515 = vmatprep.subr.bf16.mxu0 0
        %516 = vmatpush1.bf16.msra.mxu0 0
        %517 = vmatprep.subr.bf16.mxu0 0
        %518 = vmatpush1.bf16.msra.mxu0 0
        %519 = vmatprep.subr.bf16.mxu0 0
        %520 = vmatpush1.bf16.msra.mxu0 0
        %521 = vmatprep.subr.bf16.mxu0 0
        %522 = vmatpush1.bf16.msra.mxu0 0
        %523 = vmatprep.subr.bf16.mxu0 0
        %524 = vmatpush1.bf16.msra.mxu0 0
        %525 = vmatprep.subr.bf16.mxu0 0
        %526 = vmatpush1.bf16.msra.mxu0 0
        %527 = vmatprep.subr.bf16.mxu0 0
        %528 = vmatpush1.bf16.msra.mxu0 0
        %529 = vmatprep.subr.bf16.mxu0 0
        %530 = vmatpush1.bf16.msra.mxu0 0
        %531 = vmatprep.subr.bf16.mxu0 0
        %532 = vmatpush1.bf16.msra.mxu0 0
        %533 = vmatprep.subr.bf16.mxu0 0
        %534 = vmatpush1.bf16.msra.mxu0 0
        %535 = vmatprep.mubr.bf16.mxu0 0
        %536 = vmatmul.mubr.bf16.gmra.mrb[0].mxu0 %v495
        %v537 = vpop.f32.mrb[0].mxu0
        %v538 = vadd.f32 %v469, %v537
        %v539 = vpop.f32.mrb[0].mxu0
        %v540 = vpop.f32.mrb[0].mxu0
        %v541 = vadd.f32 %v469, %v540
        %v542 = vpop.f32.mrb[0].mxu0
        %543 = vmatprep.mubr.bf16.mxu0 0
        %544 = vmatmul.mubr.bf16.gmra.mrb[0].mxu0 %v497
        %v545 = vpop.f32.mrb[0].mxu0
        %v546 = vadd.f32 %v469, %v545
        %v547 = vpop.f32.mrb[0].mxu0
        %v548 = vpop.f32.mrb[0].mxu0
        %v549 = vadd.f32 %v469, %v548
        %v550 = vpop.f32.mrb[0].mxu0
        %551 = vmatprep.mubr.bf16.mxu0 0
        %552 = vmatmul.mubr.bf16.gmra.mrb[0].mxu0 %v499
        %v553 = vpop.f32.mrb[0].mxu0
        %v554 = vadd.f32 %v469, %v553
        %v555 = vpop.f32.mrb[0].mxu0
        %v556 = vpop.f32.mrb[0].mxu0
        %v557 = vadd.f32 %v469, %v556
        %v558 = vpop.f32.mrb[0].mxu0
        %559 = vmatprep.mubr.bf16.mxu0 0
        %560 = vmatmul.mubr.bf16.gmra.mrb[0].mxu0 %v501
        %v561 = vpop.f32.mrb[0].mxu0
        %v562 = vadd.f32 %v469, %v561
        %v563 = vpop.f32.mrb[0].mxu0
        %v564 = vpop.f32.mrb[0].mxu0
        %v565 = vadd.f32 %v469, %v564
        %v566 = vpop.f32.mrb[0].mxu0
        %567 = vdwg.mxu0
        %v568 = vmax.f32 %v538, 0.0
        %v569 = vmax.f32 %v541, 0.0
        %v570 = vmax.f32 %v546, 0.0
        %v571 = vmax.f32 %v549, 0.0
        %v572 = vmax.f32 %v554, 0.0
        %v573 = vmax.f32 %v557, 0.0
        %v574 = vmax.f32 %v562, 0.0
        %v575 = vmax.f32 %v565, 0.0
        %v576 = vpack.c.bf16 %v569, %v568
        %v577 = vpack.c.bf16 %v571, %v570
        %v578 = vpack.c.bf16 %v573, %v572
        %v579 = vpack.c.bf16 %v575, %v574
        %580 = vmatprep.subr.bf16.mxu0 0
        %581 = vmatpush1.bf16.msra.mxu0 %v576
        %582 = vmatprep.subr.bf16.mxu0 0
        %583 = vmatpush1.bf16.msra.mxu0 %v577
        %584 = vmatprep.subr.bf16.mxu0 0
        %585 = vmatpush1.bf16.msra.mxu0 %v578
        %586 = vmatprep.subr.bf16.mxu0 0
        %587 = vmatpush1.bf16.msra.mxu0 %v579
        %588 = vmatprep.subr.bf16.mxu0 0
        %589 = vmatpush1.bf16.msra.mxu0 0
        %590 = vmatprep.subr.bf16.mxu0 0
        %591 = vmatpush1.bf16.msra.mxu0 0
        %592 = vmatprep.subr.bf16.mxu0 0
        %593 = vmatpush1.bf16.msra.mxu0 0
        %594 = vmatprep.subr.bf16.mxu0 0
        %595 = vmatpush1.bf16.msra.mxu0 0
        %596 = vmatprep.subr.bf16.mxu0 0
        %597 = vmatpush1.bf16.msra.mxu0 0
        %598 = vmatprep.subr.bf16.mxu0 0
        %599 = vmatpush1.bf16.msra.mxu0 0
        %600 = vmatprep.subr.bf16.mxu0 0
        %601 = vmatpush1.bf16.msra.mxu0 0
        %602 = vmatprep.subr.bf16.mxu0 0
        %603 = vmatpush1.bf16.msra.mxu0 0
        %604 = vmatprep.subr.bf16.mxu0 0
        %605 = vmatpush1.bf16.msra.mxu0 0
        %606 = vmatprep.subr.bf16.mxu0 0
        %607 = vmatpush1.bf16.msra.mxu0 0
        %608 = vmatprep.subr.bf16.mxu0 0
        %609 = vmatpush1.bf16.msra.mxu0 0
        %610 = vmatprep.subr.bf16.mxu0 0
        %611 = vmatpush1.bf16.msra.mxu0 0
        %612 = vmatprep.mubr.bf16.mxu0 0
        %613 = vmatmul.mubr.bf16.gmra.mrb[0].mxu0 %v351
        %v614 = vpop.f32.mrb[0].mxu0
        %v615 = vadd.f32 0.0, %v614
        %v616 = vpop.f32.mrb[0].mxu0
        %v617 = vpop.f32.mrb[0].mxu0
        %v618 = vadd.f32 0.0, %v617
        %v619 = vpop.f32.mrb[0].mxu0
        %620 = vmatprep.mubr.bf16.mxu0 0
        %621 = vmatmul.mubr.bf16.gmra.mrb[0].mxu0 %v354
        %v622 = vpop.f32.mrb[0].mxu0
        %v623 = vadd.f32 0.0, %v622
        %v624 = vpop.f32.mrb[0].mxu0
        %v625 = vpop.f32.mrb[0].mxu0
        %v626 = vadd.f32 0.0, %v625
        %v627 = vpop.f32.mrb[0].mxu0
        %628 = vmatprep.mubr.bf16.mxu0 0
        %629 = vmatmul.mubr.bf16.gmra.mrb[0].mxu0 %v357
        %v630 = vpop.f32.mrb[0].mxu0
        %v631 = vadd.f32 0.0, %v630
        %v632 = vpop.f32.mrb[0].mxu0
        %v633 = vpop.f32.mrb[0].mxu0
        %v634 = vadd.f32 0.0, %v633
        %v635 = vpop.f32.mrb[0].mxu0
        %636 = vmatprep.mubr.bf16.mxu0 0
        %637 = vmatmul.mubr.bf16.gmra.mrb[0].mxu0 %v360
        %v638 = vpop.f32.mrb[0].mxu0
        %v639 = vadd.f32 0.0, %v638
        %v640 = vpop.f32.mrb[0].mxu0
        %v641 = vpop.f32.mrb[0].mxu0
        %v642 = vadd.f32 0.0, %v641
        %v643 = vpop.f32.mrb[0].mxu0
        %644 = vdwg.mxu0
        %v645 = vpack.c.bf16 %v618, %v615
        %v646 = vpack.c.bf16 %v626, %v623
        %v647 = vpack.c.bf16 %v634, %v631
        %v648 = vpack.c.bf16 %v642, %v639
        %653 = vrot.lane.b32.xlu0 %v645, 32
        %v654 = vpop.permute.xlu0 %653
        %655 = vrot.lane.b32.xlu0 %v646, 32
        %v656 = vpop.permute.xlu0 %655
        %657 = vrot.lane.b32.xlu0 %v647, 32
        %v658 = vpop.permute.xlu0 %657
        %659 = vrot.lane.b32.xlu0 %v648, 32
        %v660 = vpop.permute.xlu0 %659
        %v663 = vsel %vm443, %v576, %v654
        %v666 = vsel %vm443, %v577, %v656
        %v669 = vsel %vm443, %v578, %v658
        %v672 = vsel %vm443, %v579, %v660
        %v673 = vld [vmem:[%s4] sm:$0xf]
        %v674 = vld [vmem:[%s4 + $0x4] sm:$0xf]
        %v675 = vld [vmem:[%s4 + $0x8] sm:$0xf]
        %v676 = vld [vmem:[%s4 + $0xc] sm:$0xf]
        %v677 = vld [vmem:[%s4 + $0x10] sm:$0xf]
        %v678 = vld [vmem:[%s4 + $0x14] sm:$0xf]
        %v679 = vld [vmem:[%s4 + $0x18] sm:$0xf]
        %v680 = vld [vmem:[%s4 + $0x1c] sm:$0xf]
        %v681 = vld [vmem:[%s5] sm:$0x1]
        %v683 = vlaneseq
        %v684 = vshrl.u32 %v683, 7
        %v685 = vsub.s32 0, %v684
        %v686 = vrot.slane %v681, %v685
        %v696 = vunpack.c.l.b16 %v673
        %v697 = vunpack.c.l.b16 %v674
        %v698 = vunpack.c.l.b16 %v675
        %v699 = vunpack.c.l.b16 %v676
        %v700 = vunpack.c.l.b16 %v677
        %v701 = vunpack.c.l.b16 %v678
        %v702 = vunpack.c.l.b16 %v679
        %v703 = vunpack.c.l.b16 %v680
        %v704 = vpack.c.b16 %v697, %v696
        %v705 = vpack.c.b16 %v699, %v698
        %v706 = vpack.c.b16 %v701, %v700
        %v707 = vpack.c.b16 %v703, %v702
        %v712 = vsel %vm349, %v663, 0
        %v714 = vsel %vm349, %v666, 0
        %v716 = vsel %vm349, %v669, 0
        %v718 = vsel %vm349, %v672, 0
        %720 = vmatprep.subr.bf16.mxu0 0
        %721 = vmatpush1.bf16.msra.mxu0 %v704
        %722 = vmatprep.subr.bf16.mxu0 0
        %723 = vmatpush1.bf16.msra.mxu0 %v705
        %724 = vmatprep.subr.bf16.mxu0 0
        %725 = vmatpush1.bf16.msra.mxu0 %v706
        %726 = vmatprep.subr.bf16.mxu0 0
        %727 = vmatpush1.bf16.msra.mxu0 %v707
        %728 = vmatprep.subr.bf16.mxu0 0
        %729 = vmatpush1.bf16.msra.mxu0 0
        %730 = vmatprep.subr.bf16.mxu0 0
        %731 = vmatpush1.bf16.msra.mxu0 0
        %732 = vmatprep.subr.bf16.mxu0 0
        %733 = vmatpush1.bf16.msra.mxu0 0
        %734 = vmatprep.subr.bf16.mxu0 0
        %735 = vmatpush1.bf16.msra.mxu0 0
        %736 = vmatprep.subr.bf16.mxu0 0
        %737 = vmatpush1.bf16.msra.mxu0 0
        %738 = vmatprep.subr.bf16.mxu0 0
        %739 = vmatpush1.bf16.msra.mxu0 0
        %740 = vmatprep.subr.bf16.mxu0 0
        %741 = vmatpush1.bf16.msra.mxu0 0
        %742 = vmatprep.subr.bf16.mxu0 0
        %743 = vmatpush1.bf16.msra.mxu0 0
        %744 = vmatprep.subr.bf16.mxu0 0
        %745 = vmatpush1.bf16.msra.mxu0 0
        %746 = vmatprep.subr.bf16.mxu0 0
        %747 = vmatpush1.bf16.msra.mxu0 0
        %748 = vmatprep.subr.bf16.mxu0 0
        %749 = vmatpush1.bf16.msra.mxu0 0
        %750 = vmatprep.subr.bf16.mxu0 0
        %751 = vmatpush1.bf16.msra.mxu0 0
        %752 = vmatprep.mubr.bf16.mxu0 0
        %753 = vmatmul.mubr.bf16.gmra.mrb[0].mxu0 %v712
        %v754 = vpop.f32.mrb[0].mxu0
        %v755 = vadd.f32 %v686, %v754
        %v756 = vpop.f32.mrb[0].mxu0
        %v757 = vpop.f32.mrb[0].mxu0
        %v758 = vadd.f32 %v686, %v757
        %v759 = vpop.f32.mrb[0].mxu0
        %760 = vmatprep.mubr.bf16.mxu0 0
        %761 = vmatmul.mubr.bf16.gmra.mrb[0].mxu0 %v714
        %v762 = vpop.f32.mrb[0].mxu0
        %v763 = vadd.f32 %v686, %v762
        %v764 = vpop.f32.mrb[0].mxu0
        %v765 = vpop.f32.mrb[0].mxu0
        %v766 = vadd.f32 %v686, %v765
        %v767 = vpop.f32.mrb[0].mxu0
        %768 = vmatprep.mubr.bf16.mxu0 0
        %769 = vmatmul.mubr.bf16.gmra.mrb[0].mxu0 %v716
        %v770 = vpop.f32.mrb[0].mxu0
        %v771 = vadd.f32 %v686, %v770
        %v772 = vpop.f32.mrb[0].mxu0
        %v773 = vpop.f32.mrb[0].mxu0
        %v774 = vadd.f32 %v686, %v773
        %v775 = vpop.f32.mrb[0].mxu0
        %776 = vmatprep.mubr.bf16.mxu0 0
        %777 = vmatmul.mubr.bf16.gmra.mrb[0].mxu0 %v718
        %v778 = vpop.f32.mrb[0].mxu0
        %v779 = vadd.f32 %v686, %v778
        %v780 = vpop.f32.mrb[0].mxu0
        %v781 = vpop.f32.mrb[0].mxu0
        %v782 = vadd.f32 %v686, %v781
        %v783 = vpop.f32.mrb[0].mxu0
        %784 = vdwg.mxu0
        %v785 = vmax.f32 %v755, 0.0
        %v786 = vmax.f32 %v758, 0.0
        %v787 = vmax.f32 %v763, 0.0
        %v788 = vmax.f32 %v766, 0.0
        %v789 = vmax.f32 %v771, 0.0
        %v790 = vmax.f32 %v774, 0.0
        %v791 = vmax.f32 %v779, 0.0
        %v792 = vmax.f32 %v782, 0.0
        %v793 = vpack.c.bf16 %v786, %v785
        %v794 = vpack.c.bf16 %v788, %v787
        %v795 = vpack.c.bf16 %v790, %v789
        %v796 = vpack.c.bf16 %v792, %v791
        %797 = vmatprep.subr.bf16.mxu0 0
        %798 = vmatpush1.bf16.msra.mxu0 %v793
        %799 = vmatprep.subr.bf16.mxu0 0
        %800 = vmatpush1.bf16.msra.mxu0 %v794
        %801 = vmatprep.subr.bf16.mxu0 0
        %802 = vmatpush1.bf16.msra.mxu0 %v795
        %803 = vmatprep.subr.bf16.mxu0 0
        %804 = vmatpush1.bf16.msra.mxu0 %v796
        %805 = vmatprep.subr.bf16.mxu0 0
        %806 = vmatpush1.bf16.msra.mxu0 0
        %807 = vmatprep.subr.bf16.mxu0 0
        %808 = vmatpush1.bf16.msra.mxu0 0
        %809 = vmatprep.subr.bf16.mxu0 0
        %810 = vmatpush1.bf16.msra.mxu0 0
        %811 = vmatprep.subr.bf16.mxu0 0
        %812 = vmatpush1.bf16.msra.mxu0 0
        %813 = vmatprep.subr.bf16.mxu0 0
        %814 = vmatpush1.bf16.msra.mxu0 0
        %815 = vmatprep.subr.bf16.mxu0 0
        %816 = vmatpush1.bf16.msra.mxu0 0
        %817 = vmatprep.subr.bf16.mxu0 0
        %818 = vmatpush1.bf16.msra.mxu0 0
        %819 = vmatprep.subr.bf16.mxu0 0
        %820 = vmatpush1.bf16.msra.mxu0 0
        %821 = vmatprep.subr.bf16.mxu0 0
        %822 = vmatpush1.bf16.msra.mxu0 0
        %823 = vmatprep.subr.bf16.mxu0 0
        %824 = vmatpush1.bf16.msra.mxu0 0
        %825 = vmatprep.subr.bf16.mxu0 0
        %826 = vmatpush1.bf16.msra.mxu0 0
        %827 = vmatprep.subr.bf16.mxu0 0
        %828 = vmatpush1.bf16.msra.mxu0 0
        %829 = vmatprep.mubr.bf16.mxu0 0
        %830 = vmatmul.mubr.bf16.gmra.mrb[0].mxu0 %v351
        %v831 = vpop.f32.mrb[0].mxu0
        %v832 = vadd.f32 0.0, %v831
        %v833 = vpop.f32.mrb[0].mxu0
        %v834 = vpop.f32.mrb[0].mxu0
        %v835 = vadd.f32 0.0, %v834
        %v836 = vpop.f32.mrb[0].mxu0
        %837 = vmatprep.mubr.bf16.mxu0 0
        %838 = vmatmul.mubr.bf16.gmra.mrb[0].mxu0 %v354
        %v839 = vpop.f32.mrb[0].mxu0
        %v840 = vadd.f32 0.0, %v839
        %v841 = vpop.f32.mrb[0].mxu0
        %v842 = vpop.f32.mrb[0].mxu0
        %v843 = vadd.f32 0.0, %v842
        %v844 = vpop.f32.mrb[0].mxu0
        %845 = vmatprep.mubr.bf16.mxu0 0
        %846 = vmatmul.mubr.bf16.gmra.mrb[0].mxu0 %v357
        %v847 = vpop.f32.mrb[0].mxu0
        %v848 = vadd.f32 0.0, %v847
        %v849 = vpop.f32.mrb[0].mxu0
        %v850 = vpop.f32.mrb[0].mxu0
        %v851 = vadd.f32 0.0, %v850
        %v852 = vpop.f32.mrb[0].mxu0
        %853 = vmatprep.mubr.bf16.mxu0 0
        %854 = vmatmul.mubr.bf16.gmra.mrb[0].mxu0 %v360
        %v855 = vpop.f32.mrb[0].mxu0
        %v856 = vadd.f32 0.0, %v855
        %v857 = vpop.f32.mrb[0].mxu0
        %v858 = vpop.f32.mrb[0].mxu0
        %v859 = vadd.f32 0.0, %v858
        %v860 = vpop.f32.mrb[0].mxu0
        %861 = vdwg.mxu0
        %v862 = vpack.c.bf16 %v835, %v832
        %v863 = vpack.c.bf16 %v843, %v840
        %v864 = vpack.c.bf16 %v851, %v848
        %v865 = vpack.c.bf16 %v859, %v856
        %870 = vrot.lane.b32.xlu0 %v862, 32
        %v871 = vpop.permute.xlu0 %870
        %872 = vrot.lane.b32.xlu0 %v863, 32
        %v873 = vpop.permute.xlu0 %872
        %874 = vrot.lane.b32.xlu0 %v864, 32
        %v875 = vpop.permute.xlu0 %874
        %876 = vrot.lane.b32.xlu0 %v865, 32
        %v877 = vpop.permute.xlu0 %876
        %v880 = vsel %vm443, %v793, %v871
        %v883 = vsel %vm443, %v794, %v873
        %v886 = vsel %vm443, %v795, %v875
        %v889 = vsel %vm443, %v796, %v877
        %v890 = vld [vmem:[%s6] sm:$0xf]
        %v891 = vld [vmem:[%s6 + $0x4] sm:$0xf]
        %v892 = vld [vmem:[%s6 + $0x8] sm:$0xf]
        %v893 = vld [vmem:[%s6 + $0xc] sm:$0xf]
        %v894 = vld [vmem:[%s6 + $0x10] sm:$0xf]
        %v895 = vld [vmem:[%s6 + $0x14] sm:$0xf]
        %v896 = vld [vmem:[%s6 + $0x18] sm:$0xf]
        %v897 = vld [vmem:[%s6 + $0x1c] sm:$0xf]
        %v898 = vld [vmem:[%s7] sm:$0x1]
        %v900 = vlaneseq
        %v901 = vshrl.u32 %v900, 7
        %v902 = vsub.s32 0, %v901
        %v903 = vrot.slane %v898, %v902
        %v913 = vunpack.c.l.b16 %v890
        %v914 = vunpack.c.l.b16 %v891
        %v915 = vunpack.c.l.b16 %v892
        %v916 = vunpack.c.l.b16 %v893
        %v917 = vunpack.c.l.b16 %v894
        %v918 = vunpack.c.l.b16 %v895
        %v919 = vunpack.c.l.b16 %v896
        %v920 = vunpack.c.l.b16 %v897
        %v921 = vpack.c.b16 %v914, %v913
        %v922 = vpack.c.b16 %v916, %v915
        %v923 = vpack.c.b16 %v918, %v917
        %v924 = vpack.c.b16 %v920, %v919
        %v929 = vsel %vm349, %v880, 0
        %v931 = vsel %vm349, %v883, 0
        %v933 = vsel %vm349, %v886, 0
        %v935 = vsel %vm349, %v889, 0
        %937 = vmatprep.subr.bf16.mxu0 0
        %938 = vmatpush1.bf16.msra.mxu0 %v921
        %939 = vmatprep.subr.bf16.mxu0 0
        %940 = vmatpush1.bf16.msra.mxu0 %v922
        %941 = vmatprep.subr.bf16.mxu0 0
        %942 = vmatpush1.bf16.msra.mxu0 %v923
        %943 = vmatprep.subr.bf16.mxu0 0
        %944 = vmatpush1.bf16.msra.mxu0 %v924
        %945 = vmatprep.subr.bf16.mxu0 0
        %946 = vmatpush1.bf16.msra.mxu0 0
        %947 = vmatprep.subr.bf16.mxu0 0
        %948 = vmatpush1.bf16.msra.mxu0 0
        %949 = vmatprep.subr.bf16.mxu0 0
        %950 = vmatpush1.bf16.msra.mxu0 0
        %951 = vmatprep.subr.bf16.mxu0 0
        %952 = vmatpush1.bf16.msra.mxu0 0
        %953 = vmatprep.subr.bf16.mxu0 0
        %954 = vmatpush1.bf16.msra.mxu0 0
        %955 = vmatprep.subr.bf16.mxu0 0
        %956 = vmatpush1.bf16.msra.mxu0 0
        %957 = vmatprep.subr.bf16.mxu0 0
        %958 = vmatpush1.bf16.msra.mxu0 0
        %959 = vmatprep.subr.bf16.mxu0 0
        %960 = vmatpush1.bf16.msra.mxu0 0
        %961 = vmatprep.subr.bf16.mxu0 0
        %962 = vmatpush1.bf16.msra.mxu0 0
        %963 = vmatprep.subr.bf16.mxu0 0
        %964 = vmatpush1.bf16.msra.mxu0 0
        %965 = vmatprep.subr.bf16.mxu0 0
        %966 = vmatpush1.bf16.msra.mxu0 0
        %967 = vmatprep.subr.bf16.mxu0 0
        %968 = vmatpush1.bf16.msra.mxu0 0
        %969 = vmatprep.mubr.bf16.mxu0 0
        %970 = vmatmul.mubr.bf16.gmra.mrb[0].mxu0 %v929
        %v971 = vpop.f32.mrb[0].mxu0
        %v972 = vadd.f32 %v903, %v971
        %v973 = vpop.f32.mrb[0].mxu0
        %v974 = vpop.f32.mrb[0].mxu0
        %v975 = vadd.f32 %v903, %v974
        %v976 = vpop.f32.mrb[0].mxu0
        %977 = vmatprep.mubr.bf16.mxu0 0
        %978 = vmatmul.mubr.bf16.gmra.mrb[0].mxu0 %v931
        %v979 = vpop.f32.mrb[0].mxu0
        %v980 = vadd.f32 %v903, %v979
        %v981 = vpop.f32.mrb[0].mxu0
        %v982 = vpop.f32.mrb[0].mxu0
        %v983 = vadd.f32 %v903, %v982
        %v984 = vpop.f32.mrb[0].mxu0
        %985 = vmatprep.mubr.bf16.mxu0 0
        %986 = vmatmul.mubr.bf16.gmra.mrb[0].mxu0 %v933
        %v987 = vpop.f32.mrb[0].mxu0
        %v988 = vadd.f32 %v903, %v987
        %v989 = vpop.f32.mrb[0].mxu0
        %v990 = vpop.f32.mrb[0].mxu0
        %v991 = vadd.f32 %v903, %v990
        %v992 = vpop.f32.mrb[0].mxu0
        %993 = vmatprep.mubr.bf16.mxu0 0
        %994 = vmatmul.mubr.bf16.gmra.mrb[0].mxu0 %v935
        %v995 = vpop.f32.mrb[0].mxu0
        %v996 = vadd.f32 %v903, %v995
        %v997 = vpop.f32.mrb[0].mxu0
        %v998 = vpop.f32.mrb[0].mxu0
        %v999 = vadd.f32 %v903, %v998
        %v1000 = vpop.f32.mrb[0].mxu0
        %1001 = vdwg.mxu0
        %1002 = vst [vmem:[%s313] sm:$0xff] %v972
        %1003 = vst [vmem:[%s313 + $0x8] sm:$0xff] %v975
        %1004 = vst [vmem:[%s313 + $0x10] sm:$0xff] %v980
        %1005 = vst [vmem:[%s313 + $0x18] sm:$0xff] %v983
        %1006 = vst [vmem:[%s313 + $0x20] sm:$0xff] %v988
        %1007 = vst [vmem:[%s313 + $0x28] sm:$0xff] %v991
        %1008 = vst [vmem:[%s313 + $0x30] sm:$0xff] %v996
        %1009 = vst [vmem:[%s313 + $0x38] sm:$0xff] %v999
        %s1010 = sand.u32 %s208, 1
        %s1011 = scalar_lea.sflag [#allocation3], %s1010
        %s1012 = sand.u32 %s208, 1
        %s1013 = smul.addr %s1012, 64
        %s1014 = scalar_lea.vmem [#allocation2], %s1013
        // Predicated region
        $region53: #{tpu_custom_call.1} parent=51 // pred_check
          %p1015 = pneg %p218
        $region54: #{tpu_custom_call.1} parent=51 // pred_check_branch
          %1017 = sbr.rel (%p1015) target = $region56
        $region55: #{tpu_custom_call.1} parent=51 // pred_region
          %s1019 = ssub.s32 1024, 1024
          %1020 = vsyncadd %s1011, %s1019
          %s1021 = smul.addr %s22, 8
          %s1022 = smul.addr %s1021, 128
          %s1023 = scalar_lea.hbm %s8, %s1022
          %s1024 = sshll.u32 %s1014, 4
          %s1025 = int_to_ptr.vmem [resolvable:$true] %s1024
          %1030 = dma.vmem_to_hbm [thread:$0]  %s1025, 1024, %s1023, %s1011, 128, 128, 8
        $region56: #{tpu_custom_call.1} parent=51 // pred_fallthru
          _
      $region52: #{tpu_custom_call.1} parent=5 // pred_fallthru
        _
      %p1031 = scmp.le.s32.totalorder 2, %s17
      // Predicated region
      $region57: #{tpu_custom_call.1} parent=5 // pred_check
        %p1032 = pneg %p1031
      $region58: #{tpu_custom_call.1} parent=5 // pred_check_branch
        %1034 = sbr.rel (%p1032) target = $region60
      $region59: #{tpu_custom_call.1} parent=5 // pred_region
        %s1035 = ssub.s32 %s17, 2
        // Predicated region
        $region61: #{tpu_custom_call.1} parent=59 // pred_check
          %p1036 = pneg %p224
        $region62: #{tpu_custom_call.1} parent=59 // pred_check_branch
          %1038 = sbr.rel (%p1036) target = $region64
        $region63: #{tpu_custom_call.1} parent=59 // pred_region
          %s1039 = sand.u32 %s209, 1
          %s1040 = scalar_lea.sflag [#allocation3], %s1039
          %s1041 = sand.u32 %s209, 1
          %s1042 = smul.addr %s1041, 64
          %s1043 = scalar_lea.vmem [#allocation2], %s1042
          %1044 = dma.done %s1040, 1024
        $region64: #{tpu_custom_call.1} parent=59 // pred_fallthru
          _
      $region60: #{tpu_custom_call.1} parent=5 // pred_fallthru
        _
    $region6: #{tpu_custom_call.1} parent=1 // loop_footer
      %s21 = sadd.s32 1, %s17
    $region7: #{tpu_custom_call.1} parent=1 // loop_footer_branch
      %16 = sbr.rel target = $region3
    $region8: #{tpu_custom_call.1} parent=1 // loop_exit
      _
    %1045 = vsyncpa [#allocation3], 1
    %s1046 = scalar_lea.sflag [#allocation3], 1
    %1047 = vsyncpa %s1046, 1

</llo_original>
